<compile_context>
chip_gen: v7x
topology: tpu7x:2x2x1
jax: 0.10.0
libtpu: 0.0.40
codegen_flags: <defaults>
</compile_context>

<pallas_src>
import functools
import math

import jax
import jax.numpy as jnp
from jax.experimental import pallas as pl
from jax.experimental.pallas import tpu as pltpu


def _round_up(x, m):
    return (x + m - 1) // m * m


@functools.lru_cache(maxsize=1)
def _tpu_hw():
    """(usable VMEM bytes, dual_tensorcore?) — generation aware, with fallbacks."""
    kind = ""
    try:
        kind = jax.devices()[0].device_kind.lower()
    except Exception:
        pass
    dual_tc = "v7" in kind  # v7x: 2 TensorCores / chip, 64 MiB VMEM per TC
    vmem = None
    try:
        vmem = int(pltpu.get_tpu_info().vmem_capacity_bytes)
    except Exception:
        vmem = None
    if not vmem or vmem <= 0:
        vmem = (64 << 20) if dual_tc else (128 << 20)
    if dual_tc:
        vmem = min(vmem, 64 << 20)
    return vmem, dual_tc


# ----------------------------------------------------------------------------
# Kernel: one (tile_b, tile_n) output block = x_block @ w_block + bias_row
# ----------------------------------------------------------------------------
def _linear_kernel(x_ref, w_ref, b_ref, o_ref):
    # x_ref: (TB, C_in)  input dtype (f32)     w_ref: (C_in, TN) compute dtype
    # b_ref: (1, TN)     f32                   o_ref: (TB, TN)   output dtype
    x = x_ref[...].astype(w_ref.dtype)                       # VPU cast, hidden under MXU/DMA
    acc = jnp.dot(x, w_ref[...], preferred_element_type=jnp.float32)
    o_ref[...] = (acc + b_ref[...]).astype(o_ref.dtype)      # row-broadcast bias on VPU


# ----------------------------------------------------------------------------
# One-time parameter preparation (hoisted out of the forward hot path)
# ----------------------------------------------------------------------------
def prepare_linear(w_t, b, *, compute_dtype=jnp.bfloat16):
    """w_t: (C_in, C_out) f32 (transposed PyTorch weight), b: (C_out,) f32."""
    C_in, C_out = w_t.shape
    comp_bytes = jnp.dtype(compute_dtype).itemsize

    # lane-dense output: pad C_out to a multiple of 128 (256-wide when C_out
    # is already >=256, to feed the full v6e/v7x MXU; harmless on v5e).
    n_gran = 256 if C_out >= 256 else 128
    C_out_p = _round_up(max(C_out, 128), n_gran)

    vmem_cap, _ = _tpu_hw()
    w_budget = (6 << 20) if vmem_cap <= (64 << 20) else (12 << 20)
    if C_in * C_out_p * comp_bytes <= w_budget:
        tile_n = C_out_p
    else:
        tile_n = max(n_gran, (w_budget // (C_in * comp_bytes)) // n_gran * n_gran)
        C_out_p = _round_up(C_out_p, tile_n)  # pad up instead of gcd-collapsing tile_n

    w_p = jnp.zeros((C_in, C_out_p), compute_dtype).at[:, :C_out].set(
        w_t.astype(compute_dtype))
    b_p = jnp.zeros((1, C_out_p), jnp.float32).at[0, :C_out].set(
        b.astype(jnp.float32))
    return {"w": w_p, "b": b_p, "c_in": C_in, "c_out": C_out,
            "tile_n": int(tile_n)}


# ----------------------------------------------------------------------------
# Forward (EmbedExtractor.forward with return_loss=False -> embed_linear(x))
# ----------------------------------------------------------------------------
def _linear_pallas(x, prep, *, tile_b=None):
    B, C_in = x.shape
    assert C_in == prep["c_in"], "input feature dim mismatch"
    w_p, b_p = prep["w"], prep["b"]
    C_out, tile_n = prep["c_out"], prep["tile_n"]
    C_out_p = w_p.shape[1]

    out_dtype = x.dtype
    x_bytes = jnp.dtype(x.dtype).itemsize
    comp_bytes = jnp.dtype(w_p.dtype).itemsize
    out_bytes = jnp.dtype(out_dtype).itemsize

    vmem_cap, dual_tc = _tpu_hw()
    safe_vmem = int(vmem_cap * 0.85)

    def step_vmem(tb):
        # double-buffered x / weight / bias / output blocks for one grid step
        return 2 * (tb * C_in * x_bytes + C_in * tile_n * comp_bytes
                    + tile_n * 4 + tb * tile_n * out_bytes)

    if tile_b is None:
        whole_b = _round_up(B, 8)
        if C_out_p == tile_n and step_vmem(whole_b) <= min(safe_vmem, 16 << 20):
            # tiny problem: single grid step is the fastest shape on every gen
            tile_b = whole_b
        else:
            cap_b = 256 if dual_tc else 512
            if dual_tc and B > 256:
                # one tile per v7x TensorCore; 16-row rounding keeps padding small
                tile_b = min(_round_up(pl.cdiv(B, 2), 16), cap_b)
            else:
                # single-TC chips (v5e/v6e): no forced split, just cap the tile
                tile_b = min(_round_up(B, 8), cap_b)
    # shrink the batch tile until the double-buffered blocks fit in VMEM
    while tile_b > 8 and step_vmem(tile_b) > safe_vmem:
        tile_b = max(8, _round_up(tile_b // 2, 8))

    B_p = _round_up(B, tile_b)
    x_p = x if B_p == B else jnp.zeros((B_p, C_in), x.dtype).at[:B].set(x)

    grid = (C_out_p // tile_n, B_p // tile_b)   # N outermost, batch innermost

    vmem_need = step_vmem(tile_b)
    vmem_limit = min(max(int(vmem_need * 1.5) + (4 << 20), 16 << 20), safe_vmem)

    cost = pl.CostEstimate(
        flops=2 * B_p * C_in * C_out_p,
        transcendentals=0,
        bytes_accessed=(x_p.size * x_bytes + w_p.size * comp_bytes
                        + b_p.size * 4 + B_p * C_out_p * out_bytes),
    )

    out_p = pl.pallas_call(
        _linear_kernel,
        out_shape=jax.ShapeDtypeStruct((B_p, C_out_p), out_dtype),
        grid_spec=pltpu.PrefetchScalarGridSpec(
            num_scalar_prefetch=0,
            grid=grid,
            in_specs=[
                pl.BlockSpec((tile_b, C_in), lambda j, i: (i, 0)),   # x
                pl.BlockSpec((C_in, tile_n), lambda j, i: (0, j)),   # weight (resident)
                pl.BlockSpec((1, tile_n), lambda j, i: (0, j)),      # bias row
            ],
            out_specs=pl.BlockSpec((tile_b, tile_n), lambda j, i: (i, j)),
        ),
        compiler_params=pltpu.CompilerParams(
            dimension_semantics=("parallel", "parallel"),
            vmem_limit_bytes=vmem_limit,
        ),
        cost_estimate=cost,
    )(x_p, w_p, b_p)

    if B_p == B and C_out_p == C_out:
        return out_p
    return out_p[:B, :C_out]


def embed_extractor_forward(x, prep_or_w_t, b=None, *, tile_b=None,
                            compute_dtype=jnp.bfloat16):
    """EmbedExtractor.forward (return_loss=False):  embed = embed_linear(x).

    Preferred: pass a prepared-params dict from prepare_linear().  Raw
    (w_t, b) are accepted too (prepared on the fly) for convenience.
    """
    if b is not None:
        prep = prepare_linear(prep_or_w_t, b, compute_dtype=compute_dtype)
    else:
        prep = prep_or_w_t
    return _linear_pallas(x, prep, tile_b=tile_b)


# ----------------------------------------------------------------------------
# Parameter init mirroring EmbedExtractor.init_weights()
# ----------------------------------------------------------------------------
def init_embed_extractor_params(key, inchannels, inter_channels, *,
                                compute_dtype=jnp.bfloat16):
    """xavier_uniform_ weights, bias filled with 0.01; returns both raw and
    kernel-prepared (cast/padded once) parameters."""
    k1, k2 = jax.random.split(key)
    inter0, inter1 = inter_channels

    def xavier_uniform(k, fan_in, fan_out):
        limit = math.sqrt(6.0 / (fan_in + fan_out))
        # PyTorch Linear weight is (out, in); store transposed (in, out).
        return jax.random.uniform(k, (fan_in, fan_out), dtype=jnp.float32,
                                  minval=-limit, maxval=limit)

    w0 = xavier_uniform(k1, inchannels, inter0)
    b0 = jnp.full((inter0,), 0.01, dtype=jnp.float32)
    w1 = xavier_uniform(k2, inter0, inter1)
    b1 = jnp.full((inter1,), 0.01, dtype=jnp.float32)
    return {
        "embed_w_t": w0, "embed_b": b0,     # raw (for reference checks)
        "id_w_t": w1, "id_b": b1,
        "embed": prepare_linear(w0, b0, compute_dtype=compute_dtype),
        "id": prepare_linear(w1, b1, compute_dtype=compute_dtype),
    }


def _reference_linear(x, w_t, b, dtype):
    return (jnp.dot(x.astype(dtype), w_t.astype(dtype),
                    preferred_element_type=jnp.float32)
            + b.astype(jnp.float32)).astype(x.dtype)


if __name__ == "__main__":
    # Module-consistent small shapes: inchannels=256, inter_channels=(128, 64)
    inchannels = 256
    inter_channels = (128, 64)

    key = jax.random.PRNGKey(0)
    kx1, kx2, kp = jax.random.split(key, 3)
    params = init_embed_extractor_params(kp, inchannels, inter_channels)

    # ---- case 1: small batch (B=8) -> single grid step ----------------------
    x1 = jax.random.normal(kx1, (8, inchannels), dtype=jnp.float32)
    e1 = jax.block_until_ready(embed_extractor_forward(x1, params["embed"]))
    assert e1.shape == (8, inter_channels[0])
    ref1_bf16 = _reference_linear(x1, params["embed_w_t"], params["embed_b"],
                                  jnp.bfloat16)
    ref1_f32 = x1 @ params["embed_w_t"] + params["embed_b"]
    assert jnp.allclose(e1, ref1_bf16, atol=1e-2, rtol=1e-2)
    assert jnp.allclose(e1, ref1_f32, atol=5e-2, rtol=5e-2)

    # ---- case 2: non-multiple batch (B=300) -> row padding only -------------
    x2 = jax.random.normal(kx2, (300, inchannels), dtype=jnp.float32)
    e2 = jax.block_until_ready(embed_extractor_forward(x2, params["embed"]))
    assert e2.shape == (300, inter_channels[0])
    ref2_bf16 = _reference_linear(x2, params["embed_w_t"], params["embed_b"],
                                  jnp.bfloat16)
    assert jnp.allclose(e2, ref2_bf16, atol=1e-2, rtol=1e-2)

    # ---- case 3: C_out < 128 (id_linear shapes) -> lane padding -------------
    e3 = jax.block_until_ready(embed_extractor_forward(e1, params["id"]))
    assert e3.shape == (8, inter_channels[1])
    ref3_bf16 = _reference_linear(e1, params["id_w_t"], params["id_b"],
                                  jnp.bfloat16)
    assert jnp.allclose(e3, ref3_bf16, atol=1e-2, rtol=1e-2)

    # ---- case 4: explicit f32 compute opt-in (PyTorch-f32-like numerics) ----
    prep_f32 = prepare_linear(params["embed_w_t"], params["embed_b"],
                              compute_dtype=jnp.float32)
    e4 = jax.block_until_ready(embed_extractor_forward(x1, prep_f32))
    assert jnp.allclose(e4, ref1_f32, atol=2e-3, rtol=2e-3)

    # TODO(synk): forward_train (CELoss / TripletLoss, BatchNorm1d) is
    # training-only loss logic and is not part of the inference forward path.
    print("KERNEL_OK")
</pallas_src>

<mosaic_0001>
module attributes {stable_mosaic.version = 11 : i64} {
  func.func @_linear_kernel(%arg0: i32, %arg1: i32, %arg2: memref<8x256xf32, #tpu.memory_space<vmem>>, %arg3: memref<256x128xbf16, #tpu.memory_space<vmem>>, %arg4: memref<1x128xf32, #tpu.memory_space<vmem>>, %arg5: memref<8x128xf32, #tpu.memory_space<vmem>>) attributes {dimension_semantics = [#tpu.dimension_semantics<parallel>, #tpu.dimension_semantics<parallel>], iteration_bounds = array<i64: 1, 1>, scalar_prefetch = 0 : i64, scratch_operands = 0 : i64, tpu.core_type = #tpu.core_type<tc>, window_params = [{transform_indices = @transform_0, window_bounds = array<i64: 8, 256>}, {transform_indices = @transform_1, window_bounds = array<i64: 256, 128>}, {transform_indices = @transform_2, window_bounds = array<i64: 1, 128>}, {transform_indices = @transform_3, window_bounds = array<i64: 8, 128>}]} {
    %c0 = arith.constant 0 : index
    %c0_0 = arith.constant 0 : index
    %0 = vector.load %arg2[%c0, %c0_0] : memref<8x256xf32, #tpu.memory_space<vmem>>, vector<8x256xf32>
    %1 = arith.truncf %0 : vector<8x256xf32> to vector<8x256xbf16>
    %c0_1 = arith.constant 0 : index
    %c0_2 = arith.constant 0 : index
    %2 = vector.load %arg3[%c0_1, %c0_2] : memref<256x128xbf16, #tpu.memory_space<vmem>>, vector<256x128xbf16>
    %cst = arith.constant dense<0.000000e+00> : vector<8x128xf32>
    %3 = tpu.matmul %1, %2, %cst {dimension_numbers = #tpu.dot_dimension_numbers<[1], [0], [0], [1], [0, 0, 1, 1], [], []>} : vector<8x256xbf16>, vector<256x128xbf16>, vector<8x128xf32> -> vector<8x128xf32>
    %c0_3 = arith.constant 0 : index
    %c0_4 = arith.constant 0 : index
    %4 = vector.load %arg4[%c0_3, %c0_4] : memref<1x128xf32, #tpu.memory_space<vmem>>, vector<1x128xf32>
    %5 = vector.broadcast %4 : vector<1x128xf32> to vector<8x128xf32>
    %6 = arith.addf %3, %5 : vector<8x128xf32>
    %c0_5 = arith.constant 0 : index
    %c0_6 = arith.constant 0 : index
    %7 = vector.load %arg5[%c0_5, %c0_6] : memref<8x128xf32, #tpu.memory_space<vmem>>, vector<8x128xf32>
    tpu.vector_store %arg5[%c0_5, %c0_6], %6 {strides = array<i32>} : memref<8x128xf32, #tpu.memory_space<vmem>>, vector<8x128xf32>,
    return
  }
  func.func @transform_0(%arg0: i32, %arg1: i32) -> (i32, i32) {
    %c0_i32 = arith.constant 0 : i32
    %c0_i32_0 = arith.constant 0 : i32
    return %arg1, %c0_i32 : i32, i32
  }
  func.func @transform_1(%arg0: i32, %arg1: i32) -> (i32, i32) {
    %c0_i32 = arith.constant 0 : i32
    %c0_i32_0 = arith.constant 0 : i32
    return %c0_i32, %arg0 : i32, i32
  }
  func.func @transform_2(%arg0: i32, %arg1: i32) -> (i32, i32) {
    %c0_i32 = arith.constant 0 : i32
    %c0_i32_0 = arith.constant 0 : i32
    return %c0_i32, %arg0 : i32, i32
  }
  func.func @transform_3(%arg0: i32, %arg1: i32) -> (i32, i32) {
    %c0_i32 = arith.constant 0 : i32
    return %arg1, %arg0 : i32, i32
  }
}

</mosaic_0001>

<llo_original>
// kernel: tpu_custom_call.1
$region0: #{tpu_custom_call.1}
  #allocation0 [shape = 'u32[]', space=smem, size = 0x4, offset = 0x4, fixed_abs, tag = 'smem constant byte address 0x4 - core index']
  #allocation1 [shape = 'u32[144,128]{1,0:T(1,128)}', space=vmem, size = 0x12000, scoped, tag = 'internal scratch']
  %s0 = inlined_call_operand.hbm [shape: f32[8,256], index: 0, kind: input, shape index: {}]
  %s1 = inlined_call_operand.hbm [shape: bf16[256,128], index: 1, kind: input, shape index: {}]
  %s2 = inlined_call_operand.vmem [shape: f32[1,128], index: 2, kind: input, shape index: {}]
  %s3 = inlined_call_operand.hbm [shape: f32[8,128], index: 3, kind: output, shape index: {}]
  %s4 = sld [smem:[#allocation0]]
  $region30: #{tpu_custom_call.1} parent=0
    _
  %s6 = ssub.s32 1, %s4
  %s7 = scalar_select 0, %s6, %s4
  $region1: #{tpu_custom_call.1} parent=0
    #allocation2 [shape = 'u8[8192]{0}', space=vmem, size = 0x2000, scoped, tag = 'input window, operand 0, single buffered']
    #allocation3 [shape = 's32[1]{0}', space=sflag, size = 0x4, scoped, tag = 'scoped memory for tpu_custom_call.1']
    #allocation4 [shape = 's32[1]{0}', space=sflag, size = 0x4, scoped, tag = 'scoped memory for tpu_custom_call.1']
    #allocation5 [shape = 'u8[65536]{0}', space=vmem, size = 0x10000, scoped, tag = 'input window, operand 1, single buffered']
    #allocation6 [shape = 's32[1]{0}', space=sflag, size = 0x4, scoped, tag = 'scoped memory for tpu_custom_call.1']
    #allocation7 [shape = 'u8[4096]{0}', space=vmem, size = 0x1000, scoped, tag = 'output window, operand 0, single buffered']
    %8 = vsyncpa [#allocation3], 0
    %9 = vsyncpa [#allocation6], 0
    %10 = vsyncpa [#allocation4], 0
    // Predicated region
    $region2: #{tpu_custom_call.1} parent=1 // pred_check
      _
    $region3: #{tpu_custom_call.1} parent=1 // pred_check_branch
      %12 = sbr.rel (0) target = $region5
    $region4: #{tpu_custom_call.1} parent=1 // pred_region
      %s14 = ssub.s32 256, 256
      %15 = vsyncadd [#allocation3], %s14
      %s17 = sshll.u32 [#allocation2], 4
      %s18 = int_to_ptr.vmem [resolvable:$true] %s17
      %20 = dma.hbm_to_vmem [thread:$0]  %s0, 256, %s18, [#allocation3]
    $region5: #{tpu_custom_call.1} parent=1 // pred_fallthru
      _
    // Predicated region
    $region6: #{tpu_custom_call.1} parent=1 // pred_check
      _
    $region7: #{tpu_custom_call.1} parent=1 // pred_check_branch
      %22 = sbr.rel (0) target = $region9
    $region8: #{tpu_custom_call.1} parent=1 // pred_region
      %s24 = ssub.s32 2048, 2048
      %25 = vsyncadd [#allocation6], %s24
      %s26 = sshll.u32 [#allocation5], 4
      %s27 = int_to_ptr.vmem [resolvable:$true] %s26
      %32 = dma.hbm_to_vmem [thread:$0]  %s1, 2048, %s27, [#allocation6], 64, 64, 4
    $region9: #{tpu_custom_call.1} parent=1 // pred_fallthru
      _
    // Predicated region
    $region10: #{tpu_custom_call.1} parent=1 // pred_check
      _
    $region11: #{tpu_custom_call.1} parent=1 // pred_check_branch
      %34 = sbr.rel (0) target = $region13
    $region12: #{tpu_custom_call.1} parent=1 // pred_region
      _
    $region13: #{tpu_custom_call.1} parent=1 // pred_fallthru
      _
    // Predicated region
    $region14: #{tpu_custom_call.1} parent=1 // pred_check
      _
    $region15: #{tpu_custom_call.1} parent=1 // pred_check_branch
      %36 = sbr.rel (0) target = $region17
    $region16: #{tpu_custom_call.1} parent=1 // pred_region
      %37 = dma.done [#allocation3], 256
    $region17: #{tpu_custom_call.1} parent=1 // pred_fallthru
      _
    // Predicated region
    $region18: #{tpu_custom_call.1} parent=1 // pred_check
      _
    $region19: #{tpu_custom_call.1} parent=1 // pred_check_branch
      %39 = sbr.rel (0) target = $region21
    $region20: #{tpu_custom_call.1} parent=1 // pred_region
      %40 = dma.done [#allocation6], 2048
    $region21: #{tpu_custom_call.1} parent=1 // pred_fallthru
      _
    %v42 = vld [vmem:[#allocation2] sm:$0xff]
    %v43 = vld [vmem:[#allocation2 + $0x8] sm:$0xff]
    %v44 = vpack.c.bf16 %v42, %v42
    %v45 = vpack.c.bf16 %v43, %v43
    %v46 = vld [vmem:[#allocation5] sm:$0xf]
    %v47 = vld [vmem:[#allocation5 + $0x4] sm:$0xf]
    %v48 = vld [vmem:[#allocation5 + $0x8] sm:$0xf]
    %v49 = vld [vmem:[#allocation5 + $0xc] sm:$0xf]
    %v50 = vld [vmem:[#allocation5 + $0x10] sm:$0xf]
    %v51 = vld [vmem:[#allocation5 + $0x14] sm:$0xf]
    %v52 = vld [vmem:[#allocation5 + $0x18] sm:$0xf]
    %v53 = vld [vmem:[#allocation5 + $0x1c] sm:$0xf]
    %v54 = vld [vmem:[#allocation5 + $0x20] sm:$0xf]
    %v55 = vld [vmem:[#allocation5 + $0x24] sm:$0xf]
    %v56 = vld [vmem:[#allocation5 + $0x28] sm:$0xf]
    %v57 = vld [vmem:[#allocation5 + $0x2c] sm:$0xf]
    %v58 = vld [vmem:[#allocation5 + $0x30] sm:$0xf]
    %v59 = vld [vmem:[#allocation5 + $0x34] sm:$0xf]
    %v60 = vld [vmem:[#allocation5 + $0x38] sm:$0xf]
    %v61 = vld [vmem:[#allocation5 + $0x3c] sm:$0xf]
    %v62 = vld [vmem:[#allocation5 + $0x40] sm:$0xf]
    %v63 = vld [vmem:[#allocation5 + $0x44] sm:$0xf]
    %v64 = vld [vmem:[#allocation5 + $0x48] sm:$0xf]
    %v65 = vld [vmem:[#allocation5 + $0x4c] sm:$0xf]
    %v66 = vld [vmem:[#allocation5 + $0x50] sm:$0xf]
    %v67 = vld [vmem:[#allocation5 + $0x54] sm:$0xf]
    %v68 = vld [vmem:[#allocation5 + $0x58] sm:$0xf]
    %v69 = vld [vmem:[#allocation5 + $0x5c] sm:$0xf]
    %v70 = vld [vmem:[#allocation5 + $0x60] sm:$0xf]
    %v71 = vld [vmem:[#allocation5 + $0x64] sm:$0xf]
    %v72 = vld [vmem:[#allocation5 + $0x68] sm:$0xf]
    %v73 = vld [vmem:[#allocation5 + $0x6c] sm:$0xf]
    %v74 = vld [vmem:[#allocation5 + $0x70] sm:$0xf]
    %v75 = vld [vmem:[#allocation5 + $0x74] sm:$0xf]
    %v76 = vld [vmem:[#allocation5 + $0x78] sm:$0xf]
    %v77 = vld [vmem:[#allocation5 + $0x7c] sm:$0xf]
    %v78 = vld [vmem:[%s2] sm:$0x1]
    %v80 = vlaneseq
    %v81 = vshrl.u32 %v80, 7
    %v82 = vsub.s32 0, %v81
    %v83 = vrot.slane %v78, %v82
    %v117 = vunpack.c.l.b16 %v46
    %v118 = vunpack.c.l.b16 %v47
    %v119 = vunpack.c.l.b16 %v48
    %v120 = vunpack.c.l.b16 %v49
    %v121 = vunpack.c.l.b16 %v50
    %v122 = vunpack.c.l.b16 %v51
    %v123 = vunpack.c.l.b16 %v52
    %v124 = vunpack.c.l.b16 %v53
    %v125 = vunpack.c.l.b16 %v54
    %v126 = vunpack.c.l.b16 %v55
    %v127 = vunpack.c.l.b16 %v56
    %v128 = vunpack.c.l.b16 %v57
    %v129 = vunpack.c.l.b16 %v58
    %v130 = vunpack.c.l.b16 %v59
    %v131 = vunpack.c.l.b16 %v60
    %v132 = vunpack.c.l.b16 %v61
    %v133 = vunpack.c.l.b16 %v62
    %v134 = vunpack.c.l.b16 %v63
    %v135 = vunpack.c.l.b16 %v64
    %v136 = vunpack.c.l.b16 %v65
    %v137 = vunpack.c.l.b16 %v66
    %v138 = vunpack.c.l.b16 %v67
    %v139 = vunpack.c.l.b16 %v68
    %v140 = vunpack.c.l.b16 %v69
    %v141 = vunpack.c.l.b16 %v70
    %v142 = vunpack.c.l.b16 %v71
    %v143 = vunpack.c.l.b16 %v72
    %v144 = vunpack.c.l.b16 %v73
    %v145 = vunpack.c.l.b16 %v74
    %v146 = vunpack.c.l.b16 %v75
    %v147 = vunpack.c.l.b16 %v76
    %v148 = vunpack.c.l.b16 %v77
    %v149 = vpack.c.b16 %v118, %v117
    %v150 = vpack.c.b16 %v120, %v119
    %v151 = vpack.c.b16 %v122, %v121
    %v152 = vpack.c.b16 %v124, %v123
    %v153 = vpack.c.b16 %v126, %v125
    %v154 = vpack.c.b16 %v128, %v127
    %v155 = vpack.c.b16 %v130, %v129
    %v156 = vpack.c.b16 %v132, %v131
    %v157 = vpack.c.b16 %v134, %v133
    %v158 = vpack.c.b16 %v136, %v135
    %v159 = vpack.c.b16 %v138, %v137
    %v160 = vpack.c.b16 %v140, %v139
    %v161 = vpack.c.b16 %v142, %v141
    %v162 = vpack.c.b16 %v144, %v143
    %v163 = vpack.c.b16 %v146, %v145
    %v164 = vpack.c.b16 %v148, %v147
    %181 = vmatprep.subr.bf16.mxu0 0
    %182 = vmatpush1.bf16.msra.mxu0 %v149
    %183 = vmatprep.subr.bf16.mxu0 0
    %184 = vmatpush1.bf16.msra.mxu0 %v150
    %185 = vmatprep.subr.bf16.mxu0 0
    %186 = vmatpush1.bf16.msra.mxu0 %v151
    %187 = vmatprep.subr.bf16.mxu0 0
    %188 = vmatpush1.bf16.msra.mxu0 %v152
    %189 = vmatprep.subr.bf16.mxu0 0
    %190 = vmatpush1.bf16.msra.mxu0 %v153
    %191 = vmatprep.subr.bf16.mxu0 0
    %192 = vmatpush1.bf16.msra.mxu0 %v154
    %193 = vmatprep.subr.bf16.mxu0 0
    %194 = vmatpush1.bf16.msra.mxu0 %v155
    %195 = vmatprep.subr.bf16.mxu0 0
    %196 = vmatpush1.bf16.msra.mxu0 %v156
    %197 = vmatprep.subr.bf16.mxu0 0
    %198 = vmatpush1.bf16.msra.mxu0 %v157
    %199 = vmatprep.subr.bf16.mxu0 0
    %200 = vmatpush1.bf16.msra.mxu0 %v158
    %201 = vmatprep.subr.bf16.mxu0 0
    %202 = vmatpush1.bf16.msra.mxu0 %v159
    %203 = vmatprep.subr.bf16.mxu0 0
    %204 = vmatpush1.bf16.msra.mxu0 %v160
    %205 = vmatprep.subr.bf16.mxu0 0
    %206 = vmatpush1.bf16.msra.mxu0 %v161
    %207 = vmatprep.subr.bf16.mxu0 0
    %208 = vmatpush1.bf16.msra.mxu0 %v162
    %209 = vmatprep.subr.bf16.mxu0 0
    %210 = vmatpush1.bf16.msra.mxu0 %v163
    %211 = vmatprep.subr.bf16.mxu0 0
    %212 = vmatpush1.bf16.msra.mxu0 %v164
    %213 = vmatprep.mubr.bf16.mxu0 %v45
    %214 = vmatmul.mubr.bf16.gmra.mrb[0].mxu0 %v44
    %v215 = vpop.f32.mrb[0].mxu0
    %v216 = vadd.f32 %v83, %v215
    %v217 = vpop.f32.mrb[0].mxu0
    %v218 = vpop.f32.mrb[0].mxu0
    %v219 = vpop.f32.mrb[0].mxu0
    %220 = vdwg.mxu0
    %221 = vst [vmem:[#allocation7] sm:$0xff] %v216
    // Predicated region
    $region22: #{tpu_custom_call.1} parent=1 // pred_check
      _
    $region23: #{tpu_custom_call.1} parent=1 // pred_check_branch
      %223 = sbr.rel (0) target = $region25
    $region24: #{tpu_custom_call.1} parent=1 // pred_region
      %s225 = ssub.s32 128, 128
      %226 = vsyncadd [#allocation4], %s225
      %s228 = sshll.u32 [#allocation7], 4
      %s229 = int_to_ptr.vmem [resolvable:$true] %s228
      %231 = dma.vmem_to_hbm [thread:$0]  %s229, 128, %s3, [#allocation4]
    $region25: #{tpu_custom_call.1} parent=1 // pred_fallthru
      _
    // Predicated region
    $region26: #{tpu_custom_call.1} parent=1 // pred_check
      _
    $region27: #{tpu_custom_call.1} parent=1 // pred_check_branch
      %233 = sbr.rel (0) target = $region29
    $region28: #{tpu_custom_call.1} parent=1 // pred_region
      %234 = dma.done [#allocation4], 128
    $region29: #{tpu_custom_call.1} parent=1 // pred_fallthru
      _
    %235 = vsyncpa [#allocation3], 1
    %236 = vsyncpa [#allocation6], 1
    %237 = vsyncpa [#allocation4], 1

</llo_original>
